<compile_context>
chip_gen: v7x
topology: tpu7x:2x2x1
jax: 0.10.0
libtpu: 0.0.40
codegen_flags: <defaults>
</compile_context>

<pallas_src>
import jax
import jax.numpy as jnp
from jax.experimental import pallas as pl
from jax.experimental.pallas import tpu as pltpu

_TILE_TARGET_BYTES = 1 << 20   # ~1 MiB per tile -> 3 arrays x 2 buffers ~ 6 MiB resident
_SMALL_NUMEL = 1024            # below this, XLA's fused add beats pallas_call overhead


def _add_kernel(a_ref, b_ref, o_ref):
    # Pure VPU elementwise add of the current VMEM tile.
    o_ref[...] = a_ref[...] + b_ref[...]


def _pallas_add_2d(a2d, b2d, tile_r):
    """Tiled elementwise add of two equally shaped 2-D arrays."""
    rows, cols = a2d.shape
    return pl.pallas_call(
        _add_kernel,
        out_shape=jax.ShapeDtypeStruct((rows, cols), a2d.dtype),
        grid=(pl.cdiv(rows, tile_r),),
        in_specs=[
            pl.BlockSpec((tile_r, cols), lambda i: (i, 0)),
            pl.BlockSpec((tile_r, cols), lambda i: (i, 0)),
        ],
        out_specs=pl.BlockSpec((tile_r, cols), lambda i: (i, 0)),
        compiler_params=pltpu.CompilerParams(
            dimension_semantics=("parallel",),  # independent tiles; lets v7x use both TCs
        ),
    )(a2d, b2d)


def _pallas_add(a, b):
    """Elementwise add via Pallas with lane-dense flattening + tiling."""
    orig_shape = a.shape
    n = a.size

    # Tiny tensors: custom-call dispatch overhead dwarfs the HBM traffic.
    if n < _SMALL_NUMEL:
        return a + b

    itemsize = jnp.dtype(a.dtype).itemsize
    min_sub = max(8, 32 // itemsize)  # sublane quantum: 8 (f32), 16 (bf16), 32 (i8)

    # Pick the widest lane dim (multiple of 128) that divides n and leaves a
    # sublane-aligned row count.
    lane = None
    rows = None
    for cand in (1024, 512, 256, 128):
        r = n // cand
        if n % cand == 0 and r >= min_sub and r % min_sub == 0:
            lane, rows = cand, r
            break

    a_flat = a.reshape(-1)
    b_flat = b.reshape(-1)
    padded_n = n
    if lane is None:
        # Ragged size: pad up to a full (min_sub x 128) chunk, slice back after.
        lane = 128
        chunk = lane * min_sub
        padded_n = ((n + chunk - 1) // chunk) * chunk
        pad = padded_n - n
        a_flat = jnp.pad(a_flat, (0, pad))
        b_flat = jnp.pad(b_flat, (0, pad))
        rows = padded_n // lane

    a2d = a_flat.reshape(rows, lane)
    b2d = b_flat.reshape(rows, lane)

    # Tile rows so one tile is ~1 MiB (rounded down to the sublane quantum).
    tr = (_TILE_TARGET_BYTES // (lane * itemsize)) // min_sub * min_sub
    tile_r = int(min(rows, max(min_sub, tr)))

    out2d = _pallas_add_2d(a2d, b2d, tile_r)
    out = out2d.reshape(-1)
    if padded_n != n:
        out = out[:n]
    return out.reshape(orig_shape)


class Add2:
    """JAX/Pallas port of the PyTorch Add2 module.

    forward(x) where x = (a, (b0, b1)):
        index == 0 -> a + b0
        index == 1 -> a + b1
    (Add2 has no learnable parameters; c1 is unused in the reference too.)
    """

    def __init__(self, c1, index):
        self.index = index

    def __call__(self, x):
        a = x[0]
        if self.index == 0:
            b = x[1][0]
        elif self.index == 1:
            b = x[1][1]
        else:
            raise ValueError(f"unsupported index {self.index}")

        assert a.shape == b.shape, "Add2 expects matching shapes"
        return _pallas_add(a, b)


if __name__ == "__main__":
    key = jax.random.PRNGKey(0)
    k0, k1, k2 = jax.random.split(key, 3)

    # Small NCHW shapes: batch=2, channels=4, spatial=16x16 (2048 elems ->
    # goes through the Pallas path).
    shape = (2, 4, 16, 16)
    a = jax.random.normal(k0, shape, dtype=jnp.float32)
    b0 = jax.random.normal(k1, shape, dtype=jnp.float32)
    b1 = jax.random.normal(k2, shape, dtype=jnp.float32)

    # index == 0: a + b0
    mod0 = Add2(c1=4, index=0)
    out0 = jax.block_until_ready(mod0((a, (b0, b1))))
    ref0 = a + b0
    assert out0.shape == shape
    assert jnp.allclose(out0, ref0, atol=1e-6), "index=0 mismatch"

    # index == 1: a + b1
    mod1 = Add2(c1=4, index=1)
    out1 = jax.block_until_ready(mod1((a, (b0, b1))))
    ref1 = a + b1
    assert out1.shape == shape
    assert jnp.allclose(out1, ref1, atol=1e-6), "index=1 mismatch"

    print("KERNEL_OK")
</pallas_src>

<mosaic_0001>
module attributes {stable_mosaic.version = 11 : i64} {
  func.func @_add_kernel(%arg0: i32, %arg1: memref<8x256xf32, #tpu.memory_space<vmem>>, %arg2: memref<8x256xf32, #tpu.memory_space<vmem>>, %arg3: memref<8x256xf32, #tpu.memory_space<vmem>>) attributes {dimension_semantics = [#tpu.dimension_semantics<parallel>], iteration_bounds = array<i64: 1>, scalar_prefetch = 0 : i64, scratch_operands = 0 : i64, tpu.core_type = #tpu.core_type<tc>, window_params = [{transform_indices = @transform_0, window_bounds = array<i64: 8, 256>}, {transform_indices = @transform_1, window_bounds = array<i64: 8, 256>}, {transform_indices = @transform_2, window_bounds = array<i64: 8, 256>}]} {
    %c0 = arith.constant 0 : index
    %c0_0 = arith.constant 0 : index
    %0 = vector.load %arg1[%c0, %c0_0] : memref<8x256xf32, #tpu.memory_space<vmem>>, vector<8x256xf32>
    %c0_1 = arith.constant 0 : index
    %c0_2 = arith.constant 0 : index
    %1 = vector.load %arg2[%c0_1, %c0_2] : memref<8x256xf32, #tpu.memory_space<vmem>>, vector<8x256xf32>
    %2 = arith.addf %0, %1 : vector<8x256xf32>
    %c0_3 = arith.constant 0 : index
    %c0_4 = arith.constant 0 : index
    %3 = vector.load %arg3[%c0_3, %c0_4] : memref<8x256xf32, #tpu.memory_space<vmem>>, vector<8x256xf32>
    tpu.vector_store %arg3[%c0_3, %c0_4], %2 {strides = array<i32>} : memref<8x256xf32, #tpu.memory_space<vmem>>, vector<8x256xf32>,
    return
  }
  func.func @transform_0(%arg0: i32) -> (i32, i32) {
    %c0_i32 = arith.constant 0 : i32
    %c0_i32_0 = arith.constant 0 : i32
    return %arg0, %c0_i32 : i32, i32
  }
  func.func @transform_1(%arg0: i32) -> (i32, i32) {
    %c0_i32 = arith.constant 0 : i32
    %c0_i32_0 = arith.constant 0 : i32
    return %arg0, %c0_i32 : i32, i32
  }
  func.func @transform_2(%arg0: i32) -> (i32, i32) {
    %c0_i32 = arith.constant 0 : i32
    %c0_i32_0 = arith.constant 0 : i32
    return %arg0, %c0_i32 : i32, i32
  }
}

</mosaic_0001>

<llo_original>
// kernel: tpu_custom_call.1
$region0: #{tpu_custom_call.1}
  #allocation0 [shape = 'u32[]', space=smem, size = 0x4, offset = 0x4, fixed_abs, tag = 'smem constant byte address 0x4 - core index']
  #allocation1 [shape = 'u32[144,128]{1,0:T(1,128)}', space=vmem, size = 0x12000, scoped, tag = 'internal scratch']
  %s0 = inlined_call_operand.hbm [shape: f32[8,256], index: 0, kind: input, shape index: {}]
  %s1 = inlined_call_operand.hbm [shape: f32[8,256], index: 1, kind: input, shape index: {}]
  %s2 = inlined_call_operand.hbm [shape: f32[8,256], index: 2, kind: output, shape index: {}]
  %s3 = sld [smem:[#allocation0]]
  $region26: #{tpu_custom_call.1} parent=0
    _
  %s5 = ssub.s32 1, %s3
  %s6 = scalar_select 0, %s5, %s3
  $region1: #{tpu_custom_call.1} parent=0
    #allocation2 [shape = 'u8[8192]{0}', space=vmem, size = 0x2000, scoped, tag = 'input window, operand 0, single buffered']
    #allocation3 [shape = 's32[1]{0}', space=sflag, size = 0x4, scoped, tag = 'scoped memory for tpu_custom_call.1']
    #allocation4 [shape = 's32[1]{0}', space=sflag, size = 0x4, scoped, tag = 'scoped memory for tpu_custom_call.1']
    #allocation5 [shape = 'u8[8192]{0}', space=vmem, size = 0x2000, scoped, tag = 'input window, operand 1, single buffered']
    #allocation6 [shape = 's32[1]{0}', space=sflag, size = 0x4, scoped, tag = 'scoped memory for tpu_custom_call.1']
    #allocation7 [shape = 'u8[8192]{0}', space=vmem, size = 0x2000, scoped, tag = 'output window, operand 0, single buffered']
    %7 = vsyncpa [#allocation3], 0
    %8 = vsyncpa [#allocation6], 0
    %9 = vsyncpa [#allocation4], 0
    // Predicated region
    $region2: #{tpu_custom_call.1} parent=1 // pred_check
      _
    $region3: #{tpu_custom_call.1} parent=1 // pred_check_branch
      %11 = sbr.rel (0) target = $region5
    $region4: #{tpu_custom_call.1} parent=1 // pred_region
      %s13 = ssub.s32 256, 256
      %14 = vsyncadd [#allocation3], %s13
      %s16 = sshll.u32 [#allocation2], 4
      %s17 = int_to_ptr.vmem [resolvable:$true] %s16
      %19 = dma.hbm_to_vmem [thread:$0]  %s0, 256, %s17, [#allocation3]
    $region5: #{tpu_custom_call.1} parent=1 // pred_fallthru
      _
    // Predicated region
    $region6: #{tpu_custom_call.1} parent=1 // pred_check
      _
    $region7: #{tpu_custom_call.1} parent=1 // pred_check_branch
      %21 = sbr.rel (0) target = $region9
    $region8: #{tpu_custom_call.1} parent=1 // pred_region
      %s23 = ssub.s32 256, 256
      %24 = vsyncadd [#allocation6], %s23
      %s26 = sshll.u32 [#allocation5], 4
      %s27 = int_to_ptr.vmem [resolvable:$true] %s26
      %29 = dma.hbm_to_vmem [thread:$0]  %s1, 256, %s27, [#allocation6]
    $region9: #{tpu_custom_call.1} parent=1 // pred_fallthru
      _
    // Predicated region
    $region10: #{tpu_custom_call.1} parent=1 // pred_check
      _
    $region11: #{tpu_custom_call.1} parent=1 // pred_check_branch
      %31 = sbr.rel (0) target = $region13
    $region12: #{tpu_custom_call.1} parent=1 // pred_region
      %32 = dma.done [#allocation3], 256
    $region13: #{tpu_custom_call.1} parent=1 // pred_fallthru
      _
    // Predicated region
    $region14: #{tpu_custom_call.1} parent=1 // pred_check
      _
    $region15: #{tpu_custom_call.1} parent=1 // pred_check_branch
      %34 = sbr.rel (0) target = $region17
    $region16: #{tpu_custom_call.1} parent=1 // pred_region
      %35 = dma.done [#allocation6], 256
    $region17: #{tpu_custom_call.1} parent=1 // pred_fallthru
      _
    %v36 = vld [vmem:[#allocation2] sm:$0xff]
    %v37 = vld [vmem:[#allocation2 + $0x8] sm:$0xff]
    %v38 = vld [vmem:[#allocation5] sm:$0xff]
    %v39 = vld [vmem:[#allocation5 + $0x8] sm:$0xff]
    %v40 = vadd.f32 %v36, %v38
    %v41 = vadd.f32 %v37, %v39
    %42 = vst [vmem:[#allocation7] sm:$0xff] %v40
    %43 = vst [vmem:[#allocation7 + $0x8] sm:$0xff] %v41
    // Predicated region
    $region18: #{tpu_custom_call.1} parent=1 // pred_check
      _
    $region19: #{tpu_custom_call.1} parent=1 // pred_check_branch
      %45 = sbr.rel (0) target = $region21
    $region20: #{tpu_custom_call.1} parent=1 // pred_region
      %s47 = ssub.s32 256, 256
      %48 = vsyncadd [#allocation4], %s47
      %s50 = sshll.u32 [#allocation7], 4
      %s51 = int_to_ptr.vmem [resolvable:$true] %s50
      %53 = dma.vmem_to_hbm [thread:$0]  %s51, 256, %s2, [#allocation4]
    $region21: #{tpu_custom_call.1} parent=1 // pred_fallthru
      _
    // Predicated region
    $region22: #{tpu_custom_call.1} parent=1 // pred_check
      _
    $region23: #{tpu_custom_call.1} parent=1 // pred_check_branch
      %55 = sbr.rel (0) target = $region25
    $region24: #{tpu_custom_call.1} parent=1 // pred_region
      %56 = dma.done [#allocation4], 256
    $region25: #{tpu_custom_call.1} parent=1 // pred_fallthru
      _
    %57 = vsyncpa [#allocation3], 1
    %58 = vsyncpa [#allocation6], 1
    %59 = vsyncpa [#allocation4], 1

</llo_original>
